<compile_context>
chip_gen: v7x
topology: tpu7x:2x2x1
jax: 0.10.0
libtpu: 0.0.40
codegen_flags: <defaults>
</compile_context>

<pallas_src>
import functools
import math

import jax
import jax.numpy as jnp
from jax.experimental import pallas as pl
from jax.experimental.pallas import tpu as pltpu


def _round_up(x, m):
    return (x + m - 1) // m * m


def _lcm(a, b):
    return a * b // math.gcd(a, b)


def _tpu_generation():
    """Best-effort TPU generation (host-side; only used for perf heuristics)."""
    try:
        kind = jax.devices()[0].device_kind.lower()
    except Exception:
        return 6
    for g in (7, 6, 5, 4, 3, 2):
        if ("v%d" % g) in kind or ("tpu%d" % g) in kind:
            return g
    return 6


def _l2norm_rows_kernel(x_ref, o_ref, *, scale):
    # Row-wise L2 normalization (matches F.normalize eps=1e-12) with `scale`
    # folded in (1/τ for q, 1.0 for k).  NOTE: all-zero padded rows map to
    # exactly zero (0 * rsqrt(1e-24) == 0); the main kernel's `den - pad_k`
    # correction depends on this.
    x = x_ref[...]
    inv = jax.lax.rsqrt(jnp.maximum(jnp.sum(x * x, axis=-1, keepdims=True), 1e-24))
    o_ref[...] = x * (inv * scale)


def _l2norm_rows(x, tile, scale, vmem_limit):
    Mp, Dp = x.shape
    return pl.pallas_call(
        functools.partial(_l2norm_rows_kernel, scale=scale),
        out_shape=jax.ShapeDtypeStruct((Mp, Dp), jnp.float32),
        grid=(Mp // tile,),
        in_specs=[pl.BlockSpec((tile, Dp), lambda i: (i, 0))],
        out_specs=pl.BlockSpec((tile, Dp), lambda i: (i, 0)),
        compiler_params=pltpu.CompilerParams(
            dimension_semantics=("parallel",),
            vmem_limit_bytes=vmem_limit),
    )(x)


def _infonce_kernel(q_ref, kn_ref, loss_ref, pos_sc, den_sc,
                    *, group_size, m_valid, tile_q, tile_k, pad_k):
    qi = pl.program_id(0)
    ki = pl.program_id(1)
    nk = pl.num_programs(1)

    @pl.when(ki == 0)
    def _():
        pos_sc[...] = jnp.zeros_like(pos_sc)
        den_sc[...] = jnp.zeros_like(den_sc)

    # sim[r, c] = (q[r]/τ) · k[c]; q arrives pre-normalized with 1/τ folded in.
    # TODO(synk): when Dp is large enough to be MXU-bound, cast operands to
    # bf16 (keep f32 accumulation) and apply 1/τ post-dot in f32.
    sim = jax.lax.dot_general(
        q_ref[...], kn_ref[...],
        dimension_numbers=(((1,), (1,)), ((), ())),
        preferred_element_type=jnp.float32)
    e = jnp.exp(sim)                                  # [tile_q, tile_k]

    # Lane-dense row reductions on the MXU: ones(1,TK) contracted with e over
    # the key axis -> (1, TQ) partial sums (no (TQ,1)->(1,TQ) relayout).
    ones_k = jnp.ones((1, tile_k), jnp.float32)
    den_sc[...] += jax.lax.dot_general(
        ones_k, e, dimension_numbers=(((1,), (1,)), ((), ())),
        preferred_element_type=jnp.float32)

    # Positives exist only where this (q-tile, k-tile) pair overlaps in global
    # group ids (tiles are multiples of group_size, so no group straddles a
    # tile; padded rows land in groups >= M//group_size, which never collide
    # with valid groups because M is a multiple of group_size).
    q0 = qi * tile_q
    k0 = ki * tile_k

    @pl.when(jnp.logical_and(q0 < k0 + tile_k, k0 < q0 + tile_q))
    def _():
        gid_r = (q0 + jax.lax.broadcasted_iota(jnp.int32, (tile_q, 1), 0)) // group_size
        gid_c = (k0 + jax.lax.broadcasted_iota(jnp.int32, (1, tile_k), 1)) // group_size
        e_pos = jnp.where(gid_r == gid_c, e, 0.0)
        pos_sc[...] += jax.lax.dot_general(
            ones_k, e_pos, dimension_numbers=(((1,), (1,)), ((), ())),
            preferred_element_type=jnp.float32)

    # Finalize: per-row loss; correct for padded k rows (exp(0)=1 each) and
    # zero out padded q rows.  Output block is lane-dense (1,1,TQ).
    @pl.when(ki == nk - 1)
    def _():
        pos = pos_sc[...]
        den = den_sc[...] - float(pad_k)
        loss = -jnp.log(pos / (den + 1e-8) + 1e-8)
        row = q0 + jax.lax.broadcasted_iota(jnp.int32, (1, tile_q), 1)
        loss_ref[...] = jnp.where(row < m_valid, loss, 0.0)[None]


def _choose_tiles(M, Dp, group_size, mxu, vmem_budget):
    unit = _lcm(group_size, 8)                      # smallest legal tile step (40)
    m_r = _round_up(M, unit)
    tq = min(m_r, 640)                              # small q/output tile
    tk = min(m_r, _lcm(group_size, mxu))            # 640 (v5e) / 1280 (v6e, v7x)

    def fp32_bytes(tq_, tk_):
        # double-buffered q & kn blocks + sim/exp temporaries (rough estimate)
        return 4 * (2 * tq_ * Dp + 2 * tk_ * Dp + 2 * tq_ * tk_)

    # Shrink the streamed key tile first, then the q tile, to stay in budget.
    # TODO(synk): for very large Dp, tile the contraction dim instead of
    # shrinking TK (accumulate sim in an f32 scratch before exp).
    while fp32_bytes(tq, tk) > vmem_budget and tk > unit:
        tk = max(unit, _round_up(tk // 2, unit))
    while fp32_bytes(tq, tk) > vmem_budget and tq > unit:
        tq = max(unit, _round_up(tq // 2, unit))
    return tq, tk


def infonce_loss(q, k, tau=0.05, group_size=10, tile_q=None, tile_k=None):
    """q, k: [N, ...] with prod(trailing) divisible by group_size (e.g. [N, 10, D])."""
    N = q.shape[0]
    M = N * group_size
    qf = jnp.asarray(q, jnp.float32).reshape(M, -1)
    kf = jnp.asarray(k, jnp.float32).reshape(M, -1)
    D0 = qf.shape[1]
    Dp = _round_up(D0, 128)                          # lane-dense feature dim

    gen = _tpu_generation()
    mxu = 256 if gen >= 6 else 128                   # 2x256 MXU on v6e/v7x
    vmem_limit = (52 << 20) if gen >= 7 else (96 << 20)   # v7x has 64 MiB VMEM

    tq_auto, tk_auto = _choose_tiles(M, Dp, group_size, mxu, int(0.55 * vmem_limit))
    TQ = tile_q if tile_q is not None else tq_auto
    TK = tile_k if tile_k is not None else tk_auto
    assert TQ % group_size == 0 and TQ % 8 == 0
    assert TK % group_size == 0 and TK % 8 == 0

    Mq = _round_up(M, TQ)
    Mk = _round_up(M, TK)
    nq, nk = Mq // TQ, Mk // TK

    qp = jnp.pad(qf, ((0, Mq - M), (0, Dp - D0)))
    kp = jnp.pad(kf, ((0, Mk - M), (0, Dp - D0)))

    # Pre-pass: L2-normalize rows exactly once; fold 1/τ into q.
    qn = _l2norm_rows(qp, TQ, 1.0 / tau, vmem_limit)
    kn = _l2norm_rows(kp, TK, 1.0, vmem_limit)

    kernel = functools.partial(
        _infonce_kernel, group_size=group_size, m_valid=M,
        tile_q=TQ, tile_k=TK, pad_k=Mk - M)
    loss_rows = pl.pallas_call(
        kernel,
        out_shape=jax.ShapeDtypeStruct((nq, 1, TQ), jnp.float32),
        grid=(nq, nk),
        in_specs=[
            pl.BlockSpec((TQ, Dp), lambda qi, ki: (qi, 0)),   # normalized q * 1/τ
            pl.BlockSpec((TK, Dp), lambda qi, ki: (ki, 0)),   # normalized k (streamed)
        ],
        out_specs=pl.BlockSpec((1, 1, TQ), lambda qi, ki: (qi, 0, 0)),
        scratch_shapes=[
            pltpu.VMEM((1, TQ), jnp.float32),    # positive accumulator (lane-dense)
            pltpu.VMEM((1, TQ), jnp.float32),    # denominator accumulator
        ],
        compiler_params=pltpu.CompilerParams(
            dimension_semantics=("parallel", "arbitrary"),
            vmem_limit_bytes=vmem_limit),
    )(qn, kn)

    return jnp.sum(loss_rows) / M


def infonce_loss_ref(q, k, tau=0.05, group_size=10):
    """Pure-JAX reference mirroring the PyTorch forward (for sanity check)."""
    N = q.shape[0]
    M = N * group_size
    qf = q.reshape(M, -1).astype(jnp.float32)
    kf = k.reshape(M, -1).astype(jnp.float32)
    qn = qf / jnp.maximum(jnp.linalg.norm(qf, axis=-1, keepdims=True), 1e-12)
    kn = kf / jnp.maximum(jnp.linalg.norm(kf, axis=-1, keepdims=True), 1e-12)
    sim = qn @ kn.T
    idx = jnp.arange(M) // group_size
    pos_w = (idx[:, None] == idx[None, :]).astype(jnp.float32)
    e = jnp.exp(sim / tau)
    pos = jnp.sum(e * pos_w, axis=1)
    neg = jnp.sum(e * (1.0 - pos_w), axis=1)
    denom = neg + pos
    return jnp.mean(-jnp.log(pos / (denom + 1e-8) + 1e-8))


if __name__ == "__main__":
    G, D = 10, 32

    # Small case (single tile): N=2 samples, 10 clips each, 32 features.
    key = jax.random.PRNGKey(0)
    kq, kk = jax.random.split(key)
    q = jax.random.normal(kq, (2, G, D), dtype=jnp.float32)
    k = jax.random.normal(kk, (2, G, D), dtype=jnp.float32)
    loss = infonce_loss(q, k)
    jax.block_until_ready(loss)
    ref = infonce_loss_ref(q, k)
    assert jnp.allclose(loss, ref, rtol=1e-4, atol=1e-4), (loss, ref)

    # Rectangular multi-tile case (forced TQ=40, TK=80 -> 3x2 grid): exercises
    # the group-overlap positive predicate, cross-key-tile accumulation, the
    # padded-key-column correction (Mk=160 > M=100) and padded-query-row
    # masking (Mq=120 > M=100).
    q2 = jax.random.normal(jax.random.PRNGKey(1), (10, G, D), dtype=jnp.float32)
    k2 = jax.random.normal(jax.random.PRNGKey(2), (10, G, D), dtype=jnp.float32)
    loss2 = infonce_loss(q2, k2, tile_q=40, tile_k=80)
    jax.block_until_ready(loss2)
    ref2 = infonce_loss_ref(q2, k2)
    assert jnp.allclose(loss2, ref2, rtol=1e-4, atol=1e-4), (loss2, ref2)

    print("KERNEL_OK")
</pallas_src>

<mosaic_0001>
module attributes {stable_mosaic.version = 11 : i64} {
  func.func @_l2norm_rows_kernel(%arg0: i32, %arg1: memref<40x128xf32, #tpu.memory_space<vmem>>, %arg2: memref<40x128xf32, #tpu.memory_space<vmem>>) attributes {dimension_semantics = [#tpu.dimension_semantics<parallel>], iteration_bounds = array<i64: 1>, scalar_prefetch = 0 : i64, scratch_operands = 0 : i64, tpu.core_type = #tpu.core_type<tc>, window_params = [{transform_indices = @transform_0, window_bounds = array<i64: 40, 128>}, {transform_indices = @transform_1, window_bounds = array<i64: 40, 128>}]} {
    %c0 = arith.constant 0 : index
    %c0_0 = arith.constant 0 : index
    %0 = vector.load %arg1[%c0, %c0_0] : memref<40x128xf32, #tpu.memory_space<vmem>>, vector<40x128xf32>
    %1 = arith.mulf %0, %0 : vector<40x128xf32>
    %cst = arith.constant dense<0.000000e+00> : vector<40xf32>
    %2 = vector.multi_reduction <add>, %1, %cst [1] : vector<40x128xf32> to vector<40xf32>
    %3 = vector.shape_cast %2 : vector<40xf32> to vector<40x1xf32>
    %cst_1 = arith.constant 1.000000e-24 : f32
    %4 = vector.broadcast %cst_1 : f32 to vector<40x1xf32>
    %5 = arith.maximumf %3, %4 : vector<40x1xf32>
    %6 = math.rsqrt %5 : vector<40x1xf32>
    %cst_2 = arith.constant 2.000000e+01 : f32
    %7 = vector.broadcast %cst_2 : f32 to vector<40x1xf32>
    %8 = arith.mulf %6, %7 : vector<40x1xf32>
    %9 = vector.broadcast %8 : vector<40x1xf32> to vector<40x128xf32>
    %10 = arith.mulf %0, %9 : vector<40x128xf32>
    %c0_3 = arith.constant 0 : index
    %c0_4 = arith.constant 0 : index
    %11 = vector.load %arg2[%c0_3, %c0_4] : memref<40x128xf32, #tpu.memory_space<vmem>>, vector<40x128xf32>
    tpu.vector_store %arg2[%c0_3, %c0_4], %10 {strides = array<i32>} : memref<40x128xf32, #tpu.memory_space<vmem>>, vector<40x128xf32>,
    return
  }
  func.func @transform_0(%arg0: i32) -> (i32, i32) {
    %c0_i32 = arith.constant 0 : i32
    %c0_i32_0 = arith.constant 0 : i32
    return %arg0, %c0_i32 : i32, i32
  }
  func.func @transform_1(%arg0: i32) -> (i32, i32) {
    %c0_i32 = arith.constant 0 : i32
    %c0_i32_0 = arith.constant 0 : i32
    return %arg0, %c0_i32 : i32, i32
  }
}

</mosaic_0001>

<llo_original>
// kernel: tpu_custom_call.1
$region0: #{tpu_custom_call.1}
  #allocation0 [shape = 'u32[]', space=smem, size = 0x4, offset = 0x4, fixed_abs, tag = 'smem constant byte address 0x4 - core index']
  #allocation1 [shape = 'u32[144,128]{1,0:T(1,128)}', space=vmem, size = 0x12000, scoped, tag = 'internal scratch']
  %s0 = inlined_call_operand.hbm [shape: f32[40,128], index: 0, kind: input, shape index: {}]
  %s1 = inlined_call_operand.hbm [shape: f32[40,128], index: 1, kind: output, shape index: {}]
  %s2 = sld [smem:[#allocation0]]
  $region18: #{tpu_custom_call.1} parent=0
    _
  %s4 = ssub.s32 1, %s2
  %s5 = scalar_select 0, %s4, %s2
  $region1: #{tpu_custom_call.1} parent=0
    #allocation2 [shape = 'u8[20480]{0}', space=vmem, size = 0x5000, scoped, tag = 'input window, operand 0, single buffered']
    #allocation3 [shape = 's32[1]{0}', space=sflag, size = 0x4, scoped, tag = 'scoped memory for tpu_custom_call.1']
    #allocation4 [shape = 's32[1]{0}', space=sflag, size = 0x4, scoped, tag = 'scoped memory for tpu_custom_call.1']
    #allocation5 [shape = 'u8[20480]{0}', space=vmem, size = 0x5000, scoped, tag = 'output window, operand 0, single buffered']
    %6 = vsyncpa [#allocation3], 0
    %7 = vsyncpa [#allocation4], 0
    // Predicated region
    $region2: #{tpu_custom_call.1} parent=1 // pred_check
      _
    $region3: #{tpu_custom_call.1} parent=1 // pred_check_branch
      %9 = sbr.rel (0) target = $region5
    $region4: #{tpu_custom_call.1} parent=1 // pred_region
      %s11 = ssub.s32 640, 640
      %12 = vsyncadd [#allocation3], %s11
      %s13 = sshll.u32 [#allocation2], 4
      %s14 = int_to_ptr.vmem [resolvable:$true] %s13
      %19 = dma.hbm_to_vmem [thread:$0]  %s0, 640, %s14, [#allocation3], 128, 128, 8
    $region5: #{tpu_custom_call.1} parent=1 // pred_fallthru
      _
    // Predicated region
    $region6: #{tpu_custom_call.1} parent=1 // pred_check
      _
    $region7: #{tpu_custom_call.1} parent=1 // pred_check_branch
      %21 = sbr.rel (0) target = $region9
    $region8: #{tpu_custom_call.1} parent=1 // pred_region
      %22 = dma.done [#allocation3], 640
    $region9: #{tpu_custom_call.1} parent=1 // pred_fallthru
      _
    %v23 = vld [vmem:[#allocation2] sm:$0xff]
    %v24 = vld [vmem:[#allocation2 + $0x8] sm:$0xff]
    %v25 = vld [vmem:[#allocation2 + $0x10] sm:$0xff]
    %v26 = vld [vmem:[#allocation2 + $0x18] sm:$0xff]
    %v27 = vld [vmem:[#allocation2 + $0x20] sm:$0xff]
    %v28 = vmul.f32 %v23, %v23
    %v29 = vmul.f32 %v24, %v24
    %v30 = vmul.f32 %v25, %v25
    %v31 = vmul.f32 %v26, %v26
    %v32 = vmul.f32 %v27, %v27
    %33 = vadd.xlane.f32.xlu0 %v28
    %v34 = vpop.xlane.xlu0 %33
    %35 = vadd.xlane.f32.xlu0 %v29
    %v36 = vpop.xlane.xlu0 %35
    %37 = vadd.xlane.f32.xlu0 %v30
    %v38 = vpop.xlane.xlu0 %37
    %39 = vadd.xlane.f32.xlu0 %v31
    %v40 = vpop.xlane.xlu0 %39
    %41 = vadd.xlane.f32.xlu0 %v32
    %v42 = vpop.xlane.xlu0 %41
    %v43 = vmax.f32 %v34, 1e-24
    %v44 = vmax.f32 %v36, 1e-24
    %v45 = vmax.f32 %v38, 1e-24
    %v46 = vmax.f32 %v40, 1e-24
    %v47 = vmax.f32 %v42, 1e-24
    %v48 = vrsqrt.pop %v43
    %v49 = vrsqrt.pop %v44
    %v50 = vrsqrt.pop %v45
    %v51 = vrsqrt.pop %v46
    %v52 = vrsqrt.pop %v47
    %v53 = vmul.f32 %v48, 20.0
    %v54 = vmul.f32 %v49, 20.0
    %v55 = vmul.f32 %v50, 20.0
    %v56 = vmul.f32 %v51, 20.0
    %v57 = vmul.f32 %v52, 20.0
    %v58 = vmul.f32 %v23, %v53
    %v59 = vmul.f32 %v24, %v54
    %v60 = vmul.f32 %v25, %v55
    %v61 = vmul.f32 %v26, %v56
    %v62 = vmul.f32 %v27, %v57
    %63 = vst [vmem:[#allocation5] sm:$0xff] %v58
    %64 = vst [vmem:[#allocation5 + $0x8] sm:$0xff] %v59
    %65 = vst [vmem:[#allocation5 + $0x10] sm:$0xff] %v60
    %66 = vst [vmem:[#allocation5 + $0x18] sm:$0xff] %v61
    %67 = vst [vmem:[#allocation5 + $0x20] sm:$0xff] %v62
    // Predicated region
    $region10: #{tpu_custom_call.1} parent=1 // pred_check
      _
    $region11: #{tpu_custom_call.1} parent=1 // pred_check_branch
      %69 = sbr.rel (0) target = $region13
    $region12: #{tpu_custom_call.1} parent=1 // pred_region
      %s71 = ssub.s32 640, 640
      %72 = vsyncadd [#allocation4], %s71
      %s73 = sshll.u32 [#allocation5], 4
      %s74 = int_to_ptr.vmem [resolvable:$true] %s73
      %79 = dma.vmem_to_hbm [thread:$0]  %s74, 640, %s1, [#allocation4], 128, 128, 8
    $region13: #{tpu_custom_call.1} parent=1 // pred_fallthru
      _
    // Predicated region
    $region14: #{tpu_custom_call.1} parent=1 // pred_check
      _
    $region15: #{tpu_custom_call.1} parent=1 // pred_check_branch
      %81 = sbr.rel (0) target = $region17
    $region16: #{tpu_custom_call.1} parent=1 // pred_region
      %82 = dma.done [#allocation4], 640
    $region17: #{tpu_custom_call.1} parent=1 // pred_fallthru
      _
    %83 = vsyncpa [#allocation3], 1
    %84 = vsyncpa [#allocation4], 1

</llo_original>
